<compile_context>
chip_gen: v7x
topology: tpu7x:2x2x1
jax: 0.10.0
libtpu: 0.0.40
codegen_flags: <defaults>
</compile_context>

<pallas_src>
import jax
import jax.numpy as jnp
from jax.experimental import pallas as pl
from jax.experimental.pallas import tpu as pltpu


HIDDEN = 128
N_IN = 3
N_OUT = 4          # rgb (3) + density (1)
PAD_ROWS = 8       # sublane-aligned row count for the tiny feature dims
LANE = 128


def nerf_kernel(x_ref, w1_ref, w2_ref, b2_ref, w3_ref, b3_ref, out_ref):
    # x_ref : (8, tile_m) f32   rows 0-2 = x^T, row 3 = 1, rows 4-7 = 0
    # w1_ref: (128, 8)    f32   [W1^T | b1 | 0]
    # w2_ref: (128, 128)  bf16  W2^T
    # b2_ref: (128, 1)    f32
    # w3_ref: (8, 128)    bf16  [W3^T ; 0]
    # b3_ref: (8, 1)      f32
    # out_ref:(8, tile_m) f32

    # ---- fc1 + relu on the MXU (bias folded into the ones row of x) -------
    h1 = jnp.dot(w1_ref[...], x_ref[...], preferred_element_type=jnp.float32)
    h1 = jnp.maximum(h1, 0.0)                               # (128, tile_m)

    # ---- fc2 + relu on the MXU (bf16 in, f32 accumulate) -------------------
    h2 = jnp.dot(w2_ref[...], h1.astype(jnp.bfloat16),
                 preferred_element_type=jnp.float32)
    h2 = jnp.maximum(h2 + b2_ref[...], 0.0)                 # (128, tile_m)

    # ---- fc3 on the MXU -----------------------------------------------------
    out = jnp.dot(w3_ref[...], h2.astype(jnp.bfloat16),
                  preferred_element_type=jnp.float32)
    out = out + b3_ref[...]                                 # (8, tile_m)

    # ---- heads: sigmoid rows 0..2 (rgb), relu row 3 (density) --------------
    # Only tile_m/128 dense vregs; store is a full-lane (unmasked) stream.
    row = jax.lax.broadcasted_iota(jnp.int32, out.shape, 0)
    out_ref[...] = jnp.where(row < N_IN, jax.nn.sigmoid(out),
                             jnp.maximum(out, 0.0))


def _round_up(n, m):
    return ((n + m - 1) // m) * m


def nerf_forward(x, params, *, tile_m=2048):
    """x: [N, 3] float32. params: dict with [in, out] weights, [1, out] biases.

    Returns (rgb [N, 3], density [N]) matching the PyTorch module
    (sigmoid rgb, relu density).
    """
    N = x.shape[0]
    dtype = jnp.float32

    # Batch lives on the lane axis -> tile must be a multiple of 128.
    # Cap the tile so the grid has >= 2 steps when possible (v7x megacore).
    n_min = _round_up(max(N, 1), LANE)
    tile_m = _round_up(max(tile_m, LANE), LANE)
    tile_m = max(LANE, min(tile_m, _round_up(pl.cdiv(n_min, 2), LANE)))
    n_pad = _round_up(N, tile_m)
    grid = (n_pad // tile_m,)

    # ---- pack inputs / weights into the feature-major layout ---------------
    xT = jnp.transpose(x.astype(dtype))                                # (3, N)
    x_aug = jnp.concatenate(
        [xT, jnp.ones((1, N), dtype), jnp.zeros((PAD_ROWS - N_IN - 1, N), dtype)],
        axis=0)                                                        # (8, N)
    if n_pad != N:
        x_aug = jnp.pad(x_aug, ((0, 0), (0, n_pad - N)))

    w1, b1 = params["w1"], params["b1"]                  # (3,128), (1,128)
    w2, b2 = params["w2"], params["b2"]                  # (128,128), (1,128)
    w3, b3 = params["w3"], params["b3"]                  # (128,4), (1,4)

    w1a = jnp.concatenate(
        [w1.T, b1.T, jnp.zeros((HIDDEN, PAD_ROWS - N_IN - 1), dtype)],
        axis=1).astype(dtype)                            # (128, 8) f32
    w2t = w2.T.astype(jnp.bfloat16)                      # (128, 128) bf16
    b2c = b2.T.astype(dtype)                             # (128, 1)  f32
    w3t = jnp.concatenate(
        [w3.T, jnp.zeros((PAD_ROWS - N_OUT, HIDDEN), dtype)],
        axis=0).astype(jnp.bfloat16)                     # (8, 128) bf16
    b3c = jnp.concatenate(
        [b3.T, jnp.zeros((PAD_ROWS - N_OUT, 1), dtype)], axis=0)  # (8, 1) f32

    flops = 2 * n_pad * (PAD_ROWS * HIDDEN + HIDDEN * HIDDEN + HIDDEN * PAD_ROWS)
    bytes_accessed = (
        PAD_ROWS * n_pad * 4 * 2                              # x_aug in, out
        + HIDDEN * PAD_ROWS * 4 + HIDDEN * HIDDEN * 2         # w1a, w2t
        + HIDDEN * 4 + PAD_ROWS * HIDDEN * 2 + PAD_ROWS * 4)  # b2c, w3t, b3c
    cost = pl.CostEstimate(flops=flops,
                           transcendentals=3 * n_pad,
                           bytes_accessed=bytes_accessed)

    out = pl.pallas_call(
        nerf_kernel,
        out_shape=jax.ShapeDtypeStruct((PAD_ROWS, n_pad), dtype),
        grid_spec=pltpu.PrefetchScalarGridSpec(
            num_scalar_prefetch=0,
            grid=grid,
            in_specs=[
                pl.BlockSpec((PAD_ROWS, tile_m), lambda i: (0, i)),   # x_aug
                pl.BlockSpec((HIDDEN, PAD_ROWS), lambda i: (0, 0)),   # w1a
                pl.BlockSpec((HIDDEN, HIDDEN), lambda i: (0, 0)),     # w2t
                pl.BlockSpec((HIDDEN, 1), lambda i: (0, 0)),          # b2c
                pl.BlockSpec((PAD_ROWS, HIDDEN), lambda i: (0, 0)),   # w3t
                pl.BlockSpec((PAD_ROWS, 1), lambda i: (0, 0)),        # b3c
            ],
            out_specs=pl.BlockSpec((PAD_ROWS, tile_m), lambda i: (0, i)),
        ),
        compiler_params=pltpu.CompilerParams(
            dimension_semantics=("parallel",),
            vmem_limit_bytes=32 * 1024 * 1024),
        cost_estimate=cost,
    )(x_aug, w1a, w2t, b2c, w3t, b3c)

    rgb = jnp.transpose(out[:N_IN, :N])      # (N, 3)
    density = out[N_IN, :N]                  # (N,)
    return rgb, density


def init_params(key):
    """Deterministic init matching nn.Linear shapes (weights stored [in, out])."""
    k1, k2, k3, k4, k5, k6 = jax.random.split(key, 6)

    def lin(kw, kb, fan_in, fan_out):
        bound = 1.0 / jnp.sqrt(fan_in)
        w = jax.random.uniform(kw, (fan_in, fan_out), jnp.float32, -bound, bound)
        b = jax.random.uniform(kb, (1, fan_out), jnp.float32, -bound, bound)
        return w, b

    w1, b1 = lin(k1, k2, N_IN, HIDDEN)
    w2, b2 = lin(k3, k4, HIDDEN, HIDDEN)
    w3, b3 = lin(k5, k6, HIDDEN, N_OUT)
    return {"w1": w1, "b1": b1, "w2": w2, "b2": b2, "w3": w3, "b3": b3}


def nerf_reference(x, p):
    """Pure-JAX f32 reference (kernel uses bf16 matmuls -> loosened tolerance)."""
    h1 = jnp.maximum(x @ p["w1"] + p["b1"], 0.0)
    h2 = jnp.maximum(h1 @ p["w2"] + p["b2"], 0.0)
    out = h2 @ p["w3"] + p["b3"]
    return jax.nn.sigmoid(out[:, :3]), jnp.maximum(out[:, 3], 0.0)


if __name__ == "__main__":
    key = jax.random.PRNGKey(0)
    kx, kp = jax.random.split(key)
    N = 256  # batch of sample points (ray samples)
    x = jax.random.normal(kx, (N, 3), jnp.float32)
    params = init_params(kp)

    rgb, density = nerf_forward(x, params)
    rgb = jax.block_until_ready(rgb)
    density = jax.block_until_ready(density)

    rgb_ref, dens_ref = nerf_reference(x, params)
    assert rgb.shape == (N, 3) and density.shape == (N,)
    # bf16 MXU matmuls (fc2/fc3) vs f32 reference -> loosened tolerance.
    assert jnp.allclose(rgb, rgb_ref, atol=2e-2, rtol=2e-2)
    assert jnp.allclose(density, dens_ref, atol=2e-2, rtol=2e-2)

    print("KERNEL_OK")
</pallas_src>

<mosaic_0001>
module attributes {stable_mosaic.version = 11 : i64} {
  func.func @nerf_kernel(%arg0: i32, %arg1: memref<8x128xf32, #tpu.memory_space<vmem>>, %arg2: memref<128x8xf32, #tpu.memory_space<vmem>>, %arg3: memref<128x128xbf16, #tpu.memory_space<vmem>>, %arg4: memref<128x1xf32, #tpu.memory_space<vmem>>, %arg5: memref<8x128xbf16, #tpu.memory_space<vmem>>, %arg6: memref<8x1xf32, #tpu.memory_space<vmem>>, %arg7: memref<8x128xf32, #tpu.memory_space<vmem>>) attributes {dimension_semantics = [#tpu.dimension_semantics<parallel>], iteration_bounds = array<i64: 2>, scalar_prefetch = 0 : i64, scratch_operands = 0 : i64, tpu.core_type = #tpu.core_type<tc>, window_params = [{transform_indices = @transform_0, window_bounds = array<i64: 8, 128>}, {pipeline_mode = #tpu.pipeline_mode<synchronous>, transform_indices = @transform_1, window_bounds = array<i64: 128, 8>}, {pipeline_mode = #tpu.pipeline_mode<synchronous>, transform_indices = @transform_2, window_bounds = array<i64: 128, 128>}, {pipeline_mode = #tpu.pipeline_mode<synchronous>, transform_indices = @transform_3, window_bounds = array<i64: 128, 1>}, {pipeline_mode = #tpu.pipeline_mode<synchronous>, transform_indices = @transform_4, window_bounds = array<i64: 8, 128>}, {pipeline_mode = #tpu.pipeline_mode<synchronous>, transform_indices = @transform_5, window_bounds = array<i64: 8, 1>}, {transform_indices = @transform_6, window_bounds = array<i64: 8, 128>}]} {
    %c0 = arith.constant 0 : index
    %c0_0 = arith.constant 0 : index
    %0 = vector.load %arg2[%c0, %c0_0] : memref<128x8xf32, #tpu.memory_space<vmem>>, vector<128x8xf32>
    %c0_1 = arith.constant 0 : index
    %c0_2 = arith.constant 0 : index
    %1 = vector.load %arg1[%c0_1, %c0_2] : memref<8x128xf32, #tpu.memory_space<vmem>>, vector<8x128xf32>
    %cst = arith.constant dense<0.000000e+00> : vector<128x128xf32>
    %2 = tpu.matmul %0, %1, %cst {dimension_numbers = #tpu.dot_dimension_numbers<[1], [0], [0], [1], [0, 0, 1, 1], [], []>} : vector<128x8xf32>, vector<8x128xf32>, vector<128x128xf32> -> vector<128x128xf32>
    %cst_3 = arith.constant 0.000000e+00 : f32
    %3 = vector.broadcast %cst_3 : f32 to vector<128x128xf32>
    %4 = arith.maximumf %2, %3 : vector<128x128xf32>
    %c0_4 = arith.constant 0 : index
    %c0_5 = arith.constant 0 : index
    %5 = vector.load %arg3[%c0_4, %c0_5] : memref<128x128xbf16, #tpu.memory_space<vmem>>, vector<128x128xbf16>
    %6 = arith.truncf %4 : vector<128x128xf32> to vector<128x128xbf16>
    %cst_6 = arith.constant dense<0.000000e+00> : vector<128x128xf32>
    %7 = tpu.matmul %5, %6, %cst_6 {dimension_numbers = #tpu.dot_dimension_numbers<[1], [0], [0], [1], [0, 0, 1, 1], [], []>} : vector<128x128xbf16>, vector<128x128xbf16>, vector<128x128xf32> -> vector<128x128xf32>
    %c0_7 = arith.constant 0 : index
    %c0_8 = arith.constant 0 : index
    %8 = vector.load %arg4[%c0_7, %c0_8] : memref<128x1xf32, #tpu.memory_space<vmem>>, vector<128x1xf32>
    %9 = vector.broadcast %8 : vector<128x1xf32> to vector<128x128xf32>
    %10 = arith.addf %7, %9 : vector<128x128xf32>
    %cst_9 = arith.constant 0.000000e+00 : f32
    %11 = vector.broadcast %cst_9 : f32 to vector<128x128xf32>
    %12 = arith.maximumf %10, %11 : vector<128x128xf32>
    %c0_10 = arith.constant 0 : index
    %c0_11 = arith.constant 0 : index
    %13 = vector.load %arg5[%c0_10, %c0_11] : memref<8x128xbf16, #tpu.memory_space<vmem>>, vector<8x128xbf16>
    %14 = arith.truncf %12 : vector<128x128xf32> to vector<128x128xbf16>
    %cst_12 = arith.constant dense<0.000000e+00> : vector<8x128xf32>
    %15 = tpu.matmul %13, %14, %cst_12 {dimension_numbers = #tpu.dot_dimension_numbers<[1], [0], [0], [1], [0, 0, 1, 1], [], []>} : vector<8x128xbf16>, vector<128x128xbf16>, vector<8x128xf32> -> vector<8x128xf32>
    %c0_13 = arith.constant 0 : index
    %c0_14 = arith.constant 0 : index
    %16 = vector.load %arg6[%c0_13, %c0_14] : memref<8x1xf32, #tpu.memory_space<vmem>>, vector<8x1xf32>
    %17 = vector.broadcast %16 : vector<8x1xf32> to vector<8x128xf32>
    %18 = arith.addf %15, %17 : vector<8x128xf32>
    %19 = tpu.iota {dimensions = array<i32: 0>} : vector<8x128xi32>
    %c3_i32 = arith.constant 3 : i32
    %20 = vector.broadcast %c3_i32 : i32 to vector<8x128xi32>
    %21 = arith.cmpi slt, %19, %20 : vector<8x128xi32>
    %22 = arith.negf %18 : vector<8x128xf32>
    %23 = math.exp %22 : vector<8x128xf32>
    %cst_15 = arith.constant 1.000000e+00 : f32
    %24 = vector.broadcast %cst_15 : f32 to vector<8x128xf32>
    %25 = arith.addf %24, %23 : vector<8x128xf32>
    %26 = arith.divf %24, %25 : vector<8x128xf32>
    %cst_16 = arith.constant 0.000000e+00 : f32
    %27 = vector.broadcast %cst_16 : f32 to vector<8x128xf32>
    %28 = arith.maximumf %18, %27 : vector<8x128xf32>
    %29 = arith.select %21, %26, %28 : vector<8x128xi1>, vector<8x128xf32>
    %c0_17 = arith.constant 0 : index
    %c0_18 = arith.constant 0 : index
    %30 = vector.load %arg7[%c0_17, %c0_18] : memref<8x128xf32, #tpu.memory_space<vmem>>, vector<8x128xf32>
    tpu.vector_store %arg7[%c0_17, %c0_18], %29 {strides = array<i32>} : memref<8x128xf32, #tpu.memory_space<vmem>>, vector<8x128xf32>,
    return
  }
  func.func @transform_0(%arg0: i32) -> (i32, i32) {
    %c0_i32 = arith.constant 0 : i32
    %c0_i32_0 = arith.constant 0 : i32
    return %c0_i32, %arg0 : i32, i32
  }
  func.func @transform_1(%arg0: i32) -> (i32, i32) {
    %c0_i32 = arith.constant 0 : i32
    %c0_i32_0 = arith.constant 0 : i32
    %c0_i32_1 = arith.constant 0 : i32
    return %c0_i32, %c0_i32_0 : i32, i32
  }
  func.func @transform_2(%arg0: i32) -> (i32, i32) {
    %c0_i32 = arith.constant 0 : i32
    %c0_i32_0 = arith.constant 0 : i32
    %c0_i32_1 = arith.constant 0 : i32
    return %c0_i32, %c0_i32_0 : i32, i32
  }
  func.func @transform_3(%arg0: i32) -> (i32, i32) {
    %c0_i32 = arith.constant 0 : i32
    %c0_i32_0 = arith.constant 0 : i32
    %c0_i32_1 = arith.constant 0 : i32
    return %c0_i32, %c0_i32_0 : i32, i32
  }
  func.func @transform_4(%arg0: i32) -> (i32, i32) {
    %c0_i32 = arith.constant 0 : i32
    %c0_i32_0 = arith.constant 0 : i32
    %c0_i32_1 = arith.constant 0 : i32
    return %c0_i32, %c0_i32_0 : i32, i32
  }
  func.func @transform_5(%arg0: i32) -> (i32, i32) {
    %c0_i32 = arith.constant 0 : i32
    %c0_i32_0 = arith.constant 0 : i32
    %c0_i32_1 = arith.constant 0 : i32
    return %c0_i32, %c0_i32_0 : i32, i32
  }
  func.func @transform_6(%arg0: i32) -> (i32, i32) {
    %c0_i32 = arith.constant 0 : i32
    %c0_i32_0 = arith.constant 0 : i32
    return %c0_i32, %arg0 : i32, i32
  }
}

</mosaic_0001>

<llo_original>
// kernel: tpu_custom_call.1
$region0: #{tpu_custom_call.1}
  #allocation0 [shape = 'u32[]', space=smem, size = 0x4, offset = 0x4, fixed_abs, tag = 'smem constant byte address 0x4 - core index']
  #allocation1 [shape = 'u32[144,128]{1,0:T(1,128)}', space=vmem, size = 0x12000, scoped, tag = 'internal scratch']
  %s0 = inlined_call_operand.vmem [shape: f32[8,256], index: 0, kind: input, shape index: {}]
  %s1 = inlined_call_operand.vmem [shape: f32[128,8], index: 1, kind: input, shape index: {}]
  %s2 = inlined_call_operand.vmem [shape: bf16[128,128], index: 2, kind: input, shape index: {}]
  %s3 = inlined_call_operand.vmem [shape: f32[128,1], index: 3, kind: input, shape index: {}]
  %s4 = inlined_call_operand.vmem [shape: bf16[8,128], index: 4, kind: input, shape index: {}]
  %s5 = inlined_call_operand.vmem [shape: f32[8,1], index: 5, kind: input, shape index: {}]
  %s6 = inlined_call_operand.hbm [shape: f32[8,256], index: 6, kind: output, shape index: {}]
  %s7 = sld [smem:[#allocation0]]
  $region57: #{tpu_custom_call.1} parent=0
    _
  %s9 = ssub.s32 1, %s7
  %s10 = scalar_select 0, %s9, %s7
  $region1: #{tpu_custom_call.1} parent=0
    #allocation2 [shape = 'u8[8192]{0}', space=vmem, size = 0x2000, scoped, tag = 'output window, operand 0']
    #allocation3 [shape = 's32[2]{0}', space=sflag, size = 0x8, scoped, tag = 'scoped memory for tpu_custom_call.1']
    %11 = vsyncpa [#allocation3], 0
    %s12 = scalar_lea.sflag [#allocation3], 1
    %13 = vsyncpa %s12, 0
    loop: start=0, step=1, limit=4
    $region2: #{tpu_custom_call.1} parent=1 // loop_pre_header
      _
    $region3: #{tpu_custom_call.1} parent=1 // loop_header
      %s15 = sphi 0, %s19
      %p16 = scmp.ge.s32.totalorder %s15, 4
      %s25 = sphi 0, %s27
      %s28 = sphi 0, %s25
      %s29 = sphi 0, %s28
      %s45 = sphi 0, %s29
      %s49 = sphi 0, %s49
      %s51 = sphi 0, %s49
      %s52 = sphi 0, %s51
      %s66 = sphi 0, %s52
      %s70 = sphi 0, %s70
      %s72 = sphi 0, %s70
      %s73 = sphi 0, %s72
      %s87 = sphi 0, %s73
      %s91 = sphi 0, %s91
      %s93 = sphi 0, %s91
      %s94 = sphi 0, %s93
      %s108 = sphi 0, %s94
      %s112 = sphi 0, %s112
      %s114 = sphi 0, %s112
      %s115 = sphi 0, %s114
      %s129 = sphi 0, %s115
      %s133 = sphi 0, %s133
      %s135 = sphi 0, %s133
      %s136 = sphi 0, %s135
      %s150 = sphi 0, %s136
      %s156 = sphi 0, %s158
      %s159 = sphi 0, %s156
      %s160 = sphi 0, %s159
      %s176 = sphi 0, %s160
    $region4: #{tpu_custom_call.1} parent=1 // loop_header_branch
      %18 = sbr.rel (%p16) target = $region8
    $region5: #{tpu_custom_call.1} parent=1 // loop_body
      %s20 = ssub.s32 %s15, 1
      %s21 = ssub.s32 %s15, 2
      %s22 = sadd.s32 %s15, 1
      %s23 = ssub.s32 %s15, %s22
      %p24 = scmp.eq.s32.totalorder %s23, 0
      %s26 = sadd.s32 %s25, 1
      %s27 = scalar_select %p24, %s25, %s26
      %p30 = pneg %p24
      %p31 = scmp.eq.s32.totalorder %s15, 1
      %p32 = por %p30, %p31
      %p33 = scmp.ne.s32.totalorder %s25, %s28
      %p34 = scmp.eq.s32.totalorder %s15, 0
      %p35 = por %p33, %p34
      %p36 = scmp.ne.s32.totalorder %s25, %s28
      %p37 = scmp.eq.s32.totalorder %s20, 1
      %p38 = por %p36, %p37
      %p39 = scmp.ne.s32.totalorder %s28, %s29
      %p40 = scmp.eq.s32.totalorder %s20, 0
      %p41 = por %p39, %p40
      %p42 = scmp.ne.s32.totalorder %s28, %s29
      %p43 = scmp.eq.s32.totalorder %s21, 1
      %p44 = por %p42, %p43
      %p46 = scmp.ne.s32.totalorder %s29, %s45
      %p47 = scmp.eq.s32.totalorder %s21, 0
      %p48 = por %p46, %p47
      %s50 = sadd.s32 %s49, 1
      %p53 = scmp.eq.s32.totalorder %s15, 1
      %p54 = scmp.ne.s32.totalorder %s49, %s51
      %p55 = scmp.eq.s32.totalorder %s15, 0
      %p56 = por %p54, %p55
      %p57 = scmp.ne.s32.totalorder %s49, %s51
      %p58 = scmp.eq.s32.totalorder %s20, 1
      %p59 = por %p57, %p58
      %p60 = scmp.ne.s32.totalorder %s51, %s52
      %p61 = scmp.eq.s32.totalorder %s20, 0
      %p62 = por %p60, %p61
      %p63 = scmp.ne.s32.totalorder %s51, %s52
      %p64 = scmp.eq.s32.totalorder %s21, 1
      %p65 = por %p63, %p64
      %p67 = scmp.ne.s32.totalorder %s52, %s66
      %p68 = scmp.eq.s32.totalorder %s21, 0
      %p69 = por %p67, %p68
      %s71 = sadd.s32 %s70, 1
      %p74 = scmp.eq.s32.totalorder %s15, 1
      %p75 = scmp.ne.s32.totalorder %s70, %s72
      %p76 = scmp.eq.s32.totalorder %s15, 0
      %p77 = por %p75, %p76
      %p78 = scmp.ne.s32.totalorder %s70, %s72
      %p79 = scmp.eq.s32.totalorder %s20, 1
      %p80 = por %p78, %p79
      %p81 = scmp.ne.s32.totalorder %s72, %s73
      %p82 = scmp.eq.s32.totalorder %s20, 0
      %p83 = por %p81, %p82
      %p84 = scmp.ne.s32.totalorder %s72, %s73
      %p85 = scmp.eq.s32.totalorder %s21, 1
      %p86 = por %p84, %p85
      %p88 = scmp.ne.s32.totalorder %s73, %s87
      %p89 = scmp.eq.s32.totalorder %s21, 0
      %p90 = por %p88, %p89
      %s92 = sadd.s32 %s91, 1
      %p95 = scmp.eq.s32.totalorder %s15, 1
      %p96 = scmp.ne.s32.totalorder %s91, %s93
      %p97 = scmp.eq.s32.totalorder %s15, 0
      %p98 = por %p96, %p97
      %p99 = scmp.ne.s32.totalorder %s91, %s93
      %p100 = scmp.eq.s32.totalorder %s20, 1
      %p101 = por %p99, %p100
      %p102 = scmp.ne.s32.totalorder %s93, %s94
      %p103 = scmp.eq.s32.totalorder %s20, 0
      %p104 = por %p102, %p103
      %p105 = scmp.ne.s32.totalorder %s93, %s94
      %p106 = scmp.eq.s32.totalorder %s21, 1
      %p107 = por %p105, %p106
      %p109 = scmp.ne.s32.totalorder %s94, %s108
      %p110 = scmp.eq.s32.totalorder %s21, 0
      %p111 = por %p109, %p110
      %s113 = sadd.s32 %s112, 1
      %p116 = scmp.eq.s32.totalorder %s15, 1
      %p117 = scmp.ne.s32.totalorder %s112, %s114
      %p118 = scmp.eq.s32.totalorder %s15, 0
      %p119 = por %p117, %p118
      %p120 = scmp.ne.s32.totalorder %s112, %s114
      %p121 = scmp.eq.s32.totalorder %s20, 1
      %p122 = por %p120, %p121
      %p123 = scmp.ne.s32.totalorder %s114, %s115
      %p124 = scmp.eq.s32.totalorder %s20, 0
      %p125 = por %p123, %p124
      %p126 = scmp.ne.s32.totalorder %s114, %s115
      %p127 = scmp.eq.s32.totalorder %s21, 1
      %p128 = por %p126, %p127
      %p130 = scmp.ne.s32.totalorder %s115, %s129
      %p131 = scmp.eq.s32.totalorder %s21, 0
      %p132 = por %p130, %p131
      %s134 = sadd.s32 %s133, 1
      %p137 = scmp.eq.s32.totalorder %s15, 1
      %p138 = scmp.ne.s32.totalorder %s133, %s135
      %p139 = scmp.eq.s32.totalorder %s15, 0
      %p140 = por %p138, %p139
      %p141 = scmp.ne.s32.totalorder %s133, %s135
      %p142 = scmp.eq.s32.totalorder %s20, 1
      %p143 = por %p141, %p142
      %p144 = scmp.ne.s32.totalorder %s135, %s136
      %p145 = scmp.eq.s32.totalorder %s20, 0
      %p146 = por %p144, %p145
      %p147 = scmp.ne.s32.totalorder %s135, %s136
      %p148 = scmp.eq.s32.totalorder %s21, 1
      %p149 = por %p147, %p148
      %p151 = scmp.ne.s32.totalorder %s136, %s150
      %p152 = scmp.eq.s32.totalorder %s21, 0
      %p153 = por %p151, %p152
      %s154 = ssub.s32 %s15, %s22
      %p155 = scmp.eq.s32.totalorder %s154, 0
      %s157 = sadd.s32 %s156, 1
      %s158 = scalar_select %p155, %s156, %s157
      %p161 = pneg %p155
      %p162 = scmp.eq.s32.totalorder %s15, 1
      %p163 = por %p161, %p162
      %p164 = scmp.ne.s32.totalorder %s156, %s159
      %p165 = scmp.eq.s32.totalorder %s15, 0
      %p166 = por %p164, %p165
      %p167 = scmp.ne.s32.totalorder %s156, %s159
      %p168 = scmp.eq.s32.totalorder %s20, 1
      %p169 = por %p167, %p168
      %p170 = scmp.ne.s32.totalorder %s159, %s160
      %p171 = scmp.eq.s32.totalorder %s20, 0
      %p172 = por %p170, %p171
      %p173 = scmp.ne.s32.totalorder %s159, %s160
      %p174 = scmp.eq.s32.totalorder %s21, 1
      %p175 = por %p173, %p174
      %p177 = scmp.ne.s32.totalorder %s160, %s176
      %p178 = scmp.eq.s32.totalorder %s21, 0
      %p179 = por %p177, %p178
      %p180 = scmp.le.s32.totalorder 1, %s15
      %p181 = scmp.lt.s32.totalorder %s15, 3
      %p182 = pnand %p180, %p181
      %p183 = pneg %p182
      // Predicated region
      $region9: #{tpu_custom_call.1} parent=5 // pred_check
        _
      $region10: #{tpu_custom_call.1} parent=5 // pred_check_branch
        %185 = sbr.rel (%p182) target = $region12
      $region11: #{tpu_custom_call.1} parent=5 // pred_region
        %s186 = ssub.s32 %s15, 1
        // Predicated region
        $region13: #{tpu_custom_call.1} parent=11 // pred_check
          %p187 = pneg %p62
        $region14: #{tpu_custom_call.1} parent=11 // pred_check_branch
          %189 = sbr.rel (%p187) target = $region16
        $region15: #{tpu_custom_call.1} parent=11 // pred_region
          _
        $region16: #{tpu_custom_call.1} parent=11 // pred_fallthru
          _
        // Predicated region
        $region17: #{tpu_custom_call.1} parent=11 // pred_check
          %p190 = pneg %p83
        $region18: #{tpu_custom_call.1} parent=11 // pred_check_branch
          %192 = sbr.rel (%p190) target = $region20
        $region19: #{tpu_custom_call.1} parent=11 // pred_region
          _
        $region20: #{tpu_custom_call.1} parent=11 // pred_fallthru
          _
        // Predicated region
        $region21: #{tpu_custom_call.1} parent=11 // pred_check
          %p193 = pneg %p104
        $region22: #{tpu_custom_call.1} parent=11 // pred_check_branch
          %195 = sbr.rel (%p193) target = $region24
        $region23: #{tpu_custom_call.1} parent=11 // pred_region
          _
        $region24: #{tpu_custom_call.1} parent=11 // pred_fallthru
          _
        // Predicated region
        $region25: #{tpu_custom_call.1} parent=11 // pred_check
          %p196 = pneg %p125
        $region26: #{tpu_custom_call.1} parent=11 // pred_check_branch
          %198 = sbr.rel (%p196) target = $region28
        $region27: #{tpu_custom_call.1} parent=11 // pred_region
          _
        $region28: #{tpu_custom_call.1} parent=11 // pred_fallthru
          _
        // Predicated region
        $region29: #{tpu_custom_call.1} parent=11 // pred_check
          %p199 = pneg %p146
        $region30: #{tpu_custom_call.1} parent=11 // pred_check_branch
          %201 = sbr.rel (%p199) target = $region32
        $region31: #{tpu_custom_call.1} parent=11 // pred_region
          _
        $region32: #{tpu_custom_call.1} parent=11 // pred_fallthru
          _
      $region12: #{tpu_custom_call.1} parent=5 // pred_fallthru
        _
      %p202 = scmp.lt.s32.totalorder %s15, 2
      // Predicated region
      $region33: #{tpu_custom_call.1} parent=5 // pred_check
        %p203 = pneg %p202
      $region34: #{tpu_custom_call.1} parent=5 // pred_check_branch
        %205 = sbr.rel (%p203) target = $region36
      $region35: #{tpu_custom_call.1} parent=5 // pred_region
        // Predicated region
        $region37: #{tpu_custom_call.1} parent=35 // pred_check
          %p206 = pneg %p35
        $region38: #{tpu_custom_call.1} parent=35 // pred_check_branch
          %208 = sbr.rel (%p206) target = $region40
        $region39: #{tpu_custom_call.1} parent=35 // pred_region
          %p209 = scmp.lt.s32.totalorder %s15, 1
          %s210 = scalar_select %p209, %s15, 1
          %s211 = smul.addr %s210, 8
          %s212 = scalar_lea.vmem %s0, %s211
        $region40: #{tpu_custom_call.1} parent=35 // pred_fallthru
          _
      $region36: #{tpu_custom_call.1} parent=5 // pred_fallthru
        _
      %p213 = scmp.le.s32.totalorder 1, %s15
      %p214 = scmp.lt.s32.totalorder %s15, 3
      %p215 = pnand %p213, %p214
      %p216 = pneg %p215
      // Predicated region
      $region41: #{tpu_custom_call.1} parent=5 // pred_check
        _
      $region42: #{tpu_custom_call.1} parent=5 // pred_check_branch
        %218 = sbr.rel (%p215) target = $region44
      $region43: #{tpu_custom_call.1} parent=5 // pred_region
        %s219 = ssub.s32 %s15, 1
        %p220 = scmp.lt.s32.totalorder %s20, 1
        %s221 = scalar_select %p220, %s20, 1
        %s222 = smul.addr %s221, 8
        %s223 = scalar_lea.vmem %s0, %s222
        %p224 = pneg %p41
        %p225 = pneg %p38
        %p226 = pneg %p62
        %p227 = pneg %p59
        %p228 = pneg %p83
        %p229 = pneg %p80
        %p230 = pneg %p104
        %p231 = pneg %p101
        %p232 = pneg %p125
        %p233 = pneg %p122
        %p234 = pneg %p146
        %p235 = pneg %p143
        %p236 = pneg %p172
        %p237 = pneg %p169
        %s238 = sand.u32 %s159, 1
        %s239 = scalar_lea.sflag [#allocation3], %s238
        %s240 = sand.u32 %s159, 1
        %s241 = smul.addr %s240, 8
        %s242 = scalar_lea.vmem [#allocation2], %s241
        %p243 = scmp.lt.s32.totalorder %s20, 1
        %s244 = scalar_select %p243, %s20, 1
        %s245 = smul.addr %s244, 8
        %s246 = scalar_lea.vmem %s0, %s245
        %v248 = vld [vmem:[%s1] sm:$0xff]
        %v249 = vld [vmem:[%s1 + $0x8] sm:$0xff]
        %v250 = vld [vmem:[%s1 + $0x10] sm:$0xff]
        %v251 = vld [vmem:[%s1 + $0x18] sm:$0xff]
        %v252 = vld [vmem:[%s1 + $0x20] sm:$0xff]
        %v253 = vld [vmem:[%s1 + $0x28] sm:$0xff]
        %v254 = vld [vmem:[%s1 + $0x30] sm:$0xff]
        %v255 = vld [vmem:[%s1 + $0x38] sm:$0xff]
        %v256 = vld [vmem:[%s1 + $0x40] sm:$0xff]
        %v257 = vld [vmem:[%s1 + $0x48] sm:$0xff]
        %v258 = vld [vmem:[%s1 + $0x50] sm:$0xff]
        %v259 = vld [vmem:[%s1 + $0x58] sm:$0xff]
        %v260 = vld [vmem:[%s1 + $0x60] sm:$0xff]
        %v261 = vld [vmem:[%s1 + $0x68] sm:$0xff]
        %v262 = vld [vmem:[%s1 + $0x70] sm:$0xff]
        %v263 = vld [vmem:[%s1 + $0x78] sm:$0xff]
        %v264 = vld [vmem:[%s246] sm:$0xff]
        %vm265 = vcmask 64512
        %v267 = vsel %vm265, %v248, 0
        %v270 = vsel %vm265, %v249, 0
        %v273 = vsel %vm265, %v250, 0
        %v276 = vsel %vm265, %v251, 0
        %v279 = vsel %vm265, %v252, 0
        %v282 = vsel %vm265, %v253, 0
        %v285 = vsel %vm265, %v254, 0
        %v288 = vsel %vm265, %v255, 0
        %v291 = vsel %vm265, %v256, 0
        %v294 = vsel %vm265, %v257, 0
        %v297 = vsel %vm265, %v258, 0
        %v300 = vsel %vm265, %v259, 0
        %v303 = vsel %vm265, %v260, 0
        %v306 = vsel %vm265, %v261, 0
        %v309 = vsel %vm265, %v262, 0
        %v312 = vsel %vm265, %v263, 0
        %314 = vmatprep.subr.mxu0 0.0
        %315 = vmatpush1.msra.mxu0 %v264
        %316 = vmatprep.subr.mxu0 0.0
        %317 = vmatpush1.msra.mxu0 0.0
        %318 = vmatprep.subr.mxu0 0.0
        %319 = vmatpush1.msra.mxu0 0.0
        %320 = vmatprep.subr.mxu0 0.0
        %321 = vmatpush1.msra.mxu0 0.0
        %322 = vmatprep.subr.mxu0 0.0
        %323 = vmatpush1.msra.mxu0 0.0
        %324 = vmatprep.subr.mxu0 0.0
        %325 = vmatpush1.msra.mxu0 0.0
        %326 = vmatprep.subr.mxu0 0.0
        %327 = vmatpush1.msra.mxu0 0.0
        %328 = vmatprep.subr.mxu0 0.0
        %329 = vmatpush1.msra.mxu0 0.0
        %330 = vmatprep.subr.mxu0 0.0
        %331 = vmatpush1.msra.mxu0 0.0
        %332 = vmatprep.subr.mxu0 0.0
        %333 = vmatpush1.msra.mxu0 0.0
        %334 = vmatprep.subr.mxu0 0.0
        %335 = vmatpush1.msra.mxu0 0.0
        %336 = vmatprep.subr.mxu0 0.0
        %337 = vmatpush1.msra.mxu0 0.0
        %338 = vmatprep.subr.mxu0 0.0
        %339 = vmatpush1.msra.mxu0 0.0
        %340 = vmatprep.subr.mxu0 0.0
        %341 = vmatpush1.msra.mxu0 0.0
        %342 = vmatprep.subr.mxu0 0.0
        %343 = vmatpush1.msra.mxu0 0.0
        %344 = vmatprep.subr.mxu0 0.0
        %345 = vmatpush1.msra.mxu0 0.0
        %346 = vmatprep.subr.mxu0 0.0
        %347 = vmatpush1.msra.mxu0 0.0
        %348 = vmatprep.subr.mxu0 0.0
        %349 = vmatpush1.msra.mxu0 0.0
        %350 = vmatprep.subr.mxu0 0.0
        %351 = vmatpush1.msra.mxu0 0.0
        %352 = vmatprep.subr.mxu0 0.0
        %353 = vmatpush1.msra.mxu0 0.0
        %354 = vmatprep.subr.mxu0 0.0
        %355 = vmatpush1.msra.mxu0 0.0
        %356 = vmatprep.subr.mxu0 0.0
        %357 = vmatpush1.msra.mxu0 0.0
        %358 = vmatprep.subr.mxu0 0.0
        %359 = vmatpush1.msra.mxu0 0.0
        %360 = vmatprep.subr.mxu0 0.0
        %361 = vmatpush1.msra.mxu0 0.0
        %362 = vmatprep.subr.mxu0 0.0
        %363 = vmatpush1.msra.mxu0 0.0
        %364 = vmatprep.subr.mxu0 0.0
        %365 = vmatpush1.msra.mxu0 0.0
        %366 = vmatprep.subr.mxu0 0.0
        %367 = vmatpush1.msra.mxu0 0.0
        %368 = vmatprep.subr.mxu0 0.0
        %369 = vmatpush1.msra.mxu0 0.0
        %370 = vmatprep.subr.mxu0 0.0
        %371 = vmatpush1.msra.mxu0 0.0
        %372 = vmatprep.subr.mxu0 0.0
        %373 = vmatpush1.msra.mxu0 0.0
        %374 = vmatprep.subr.mxu0 0.0
        %375 = vmatpush1.msra.mxu0 0.0
        %376 = vmatprep.subr.mxu0 0.0
        %377 = vmatpush1.msra.mxu0 0.0
        %378 = vmatprep.mubr.f32.mxu0 0.0
        %379 = vmatmul.mubr.f32.gmra.mrb[0].mxu0 %v267
        %v380 = vpop.f32.mrb[0].mxu0
        %v381 = vadd.f32 0.0, %v380
        %v382 = vpop.f32.mrb[0].mxu0
        %383 = vmatprep.mubr.f32.mxu0 0.0
        %384 = vmatmul.mubr.f32.gmra.mrb[0].mxu0 %v270
        %v385 = vpop.f32.mrb[0].mxu0
        %v386 = vadd.f32 0.0, %v385
        %v387 = vpop.f32.mrb[0].mxu0
        %388 = vmatprep.mubr.f32.mxu0 0.0
        %389 = vmatmul.mubr.f32.gmra.mrb[0].mxu0 %v273
        %v390 = vpop.f32.mrb[0].mxu0
        %v391 = vadd.f32 0.0, %v390
        %v392 = vpop.f32.mrb[0].mxu0
        %393 = vmatprep.mubr.f32.mxu0 0.0
        %394 = vmatmul.mubr.f32.gmra.mrb[0].mxu0 %v276
        %v395 = vpop.f32.mrb[0].mxu0
        %v396 = vadd.f32 0.0, %v395
        %v397 = vpop.f32.mrb[0].mxu0
        %398 = vmatprep.mubr.f32.mxu0 0.0
        %399 = vmatmul.mubr.f32.gmra.mrb[0].mxu0 %v279
        %v400 = vpop.f32.mrb[0].mxu0
        %v401 = vadd.f32 0.0, %v400
        %v402 = vpop.f32.mrb[0].mxu0
        %403 = vmatprep.mubr.f32.mxu0 0.0
        %404 = vmatmul.mubr.f32.gmra.mrb[0].mxu0 %v282
        %v405 = vpop.f32.mrb[0].mxu0
        %v406 = vadd.f32 0.0, %v405
        %v407 = vpop.f32.mrb[0].mxu0
        %408 = vmatprep.mubr.f32.mxu0 0.0
        %409 = vmatmul.mubr.f32.gmra.mrb[0].mxu0 %v285
        %v410 = vpop.f32.mrb[0].mxu0
        %v411 = vadd.f32 0.0, %v410
        %v412 = vpop.f32.mrb[0].mxu0
        %413 = vmatprep.mubr.f32.mxu0 0.0
        %414 = vmatmul.mubr.f32.gmra.mrb[0].mxu0 %v288
        %v415 = vpop.f32.mrb[0].mxu0
        %v416 = vadd.f32 0.0, %v415
        %v417 = vpop.f32.mrb[0].mxu0
        %418 = vmatprep.mubr.f32.mxu0 0.0
        %419 = vmatmul.mubr.f32.gmra.mrb[0].mxu0 %v291
        %v420 = vpop.f32.mrb[0].mxu0
        %v421 = vadd.f32 0.0, %v420
        %v422 = vpop.f32.mrb[0].mxu0
        %423 = vmatprep.mubr.f32.mxu0 0.0
        %424 = vmatmul.mubr.f32.gmra.mrb[0].mxu0 %v294
        %v425 = vpop.f32.mrb[0].mxu0
        %v426 = vadd.f32 0.0, %v425
        %v427 = vpop.f32.mrb[0].mxu0
        %428 = vmatprep.mubr.f32.mxu0 0.0
        %429 = vmatmul.mubr.f32.gmra.mrb[0].mxu0 %v297
        %v430 = vpop.f32.mrb[0].mxu0
        %v431 = vadd.f32 0.0, %v430
        %v432 = vpop.f32.mrb[0].mxu0
        %433 = vmatprep.mubr.f32.mxu0 0.0
        %434 = vmatmul.mubr.f32.gmra.mrb[0].mxu0 %v300
        %v435 = vpop.f32.mrb[0].mxu0
        %v436 = vadd.f32 0.0, %v435
        %v437 = vpop.f32.mrb[0].mxu0
        %438 = vmatprep.mubr.f32.mxu0 0.0
        %439 = vmatmul.mubr.f32.gmra.mrb[0].mxu0 %v303
        %v440 = vpop.f32.mrb[0].mxu0
        %v441 = vadd.f32 0.0, %v440
        %v442 = vpop.f32.mrb[0].mxu0
        %443 = vmatprep.mubr.f32.mxu0 0.0
        %444 = vmatmul.mubr.f32.gmra.mrb[0].mxu0 %v306
        %v445 = vpop.f32.mrb[0].mxu0
        %v446 = vadd.f32 0.0, %v445
        %v447 = vpop.f32.mrb[0].mxu0
        %448 = vmatprep.mubr.f32.mxu0 0.0
        %449 = vmatmul.mubr.f32.gmra.mrb[0].mxu0 %v309
        %v450 = vpop.f32.mrb[0].mxu0
        %v451 = vadd.f32 0.0, %v450
        %v452 = vpop.f32.mrb[0].mxu0
        %453 = vmatprep.mubr.f32.mxu0 0.0
        %454 = vmatmul.mubr.f32.gmra.mrb[0].mxu0 %v312
        %v455 = vpop.f32.mrb[0].mxu0
        %v456 = vadd.f32 0.0, %v455
        %v457 = vpop.f32.mrb[0].mxu0
        %458 = vdwg.mxu0
        %v459 = vmax.f32 %v381, 0.0
        %v460 = vmax.f32 %v386, 0.0
        %v461 = vmax.f32 %v391, 0.0
        %v462 = vmax.f32 %v396, 0.0
        %v463 = vmax.f32 %v401, 0.0
        %v464 = vmax.f32 %v406, 0.0
        %v465 = vmax.f32 %v411, 0.0
        %v466 = vmax.f32 %v416, 0.0
        %v467 = vmax.f32 %v421, 0.0
        %v468 = vmax.f32 %v426, 0.0
        %v469 = vmax.f32 %v431, 0.0
        %v470 = vmax.f32 %v436, 0.0
        %v471 = vmax.f32 %v441, 0.0
        %v472 = vmax.f32 %v446, 0.0
        %v473 = vmax.f32 %v451, 0.0
        %v474 = vmax.f32 %v456, 0.0
        %v475 = vld [vmem:[%s2] sm:$0xf]
        %v476 = vld [vmem:[%s2 + $0x4] sm:$0xf]
        %v477 = vld [vmem:[%s2 + $0x8] sm:$0xf]
        %v478 = vld [vmem:[%s2 + $0xc] sm:$0xf]
        %v479 = vld [vmem:[%s2 + $0x10] sm:$0xf]
        %v480 = vld [vmem:[%s2 + $0x14] sm:$0xf]
        %v481 = vld [vmem:[%s2 + $0x18] sm:$0xf]
        %v482 = vld [vmem:[%s2 + $0x1c] sm:$0xf]
        %v483 = vld [vmem:[%s2 + $0x20] sm:$0xf]
        %v484 = vld [vmem:[%s2 + $0x24] sm:$0xf]
        %v485 = vld [vmem:[%s2 + $0x28] sm:$0xf]
        %v486 = vld [vmem:[%s2 + $0x2c] sm:$0xf]
        %v487 = vld [vmem:[%s2 + $0x30] sm:$0xf]
        %v488 = vld [vmem:[%s2 + $0x34] sm:$0xf]
        %v489 = vld [vmem:[%s2 + $0x38] sm:$0xf]
        %v490 = vld [vmem:[%s2 + $0x3c] sm:$0xf]
        %v491 = vpack.c.bf16 %v460, %v459
        %v492 = vpack.c.bf16 %v462, %v461
        %v493 = vpack.c.bf16 %v464, %v463
        %v494 = vpack.c.bf16 %v466, %v465
        %v495 = vpack.c.bf16 %v468, %v467
        %v496 = vpack.c.bf16 %v470, %v469
        %v497 = vpack.c.bf16 %v472, %v471
        %v498 = vpack.c.bf16 %v474, %v473
        %v499 = vld [vmem:[%s3] sm:$0xff]
        %v500 = vld [vmem:[%s3 + $0x8] sm:$0xff]
        %v501 = vld [vmem:[%s3 + $0x10] sm:$0xff]
        %v502 = vld [vmem:[%s3 + $0x18] sm:$0xff]
        %v503 = vld [vmem:[%s3 + $0x20] sm:$0xff]
        %v504 = vld [vmem:[%s3 + $0x28] sm:$0xff]
        %v505 = vld [vmem:[%s3 + $0x30] sm:$0xff]
        %v506 = vld [vmem:[%s3 + $0x38] sm:$0xff]
        %v507 = vld [vmem:[%s3 + $0x40] sm:$0xff]
        %v508 = vld [vmem:[%s3 + $0x48] sm:$0xff]
        %v509 = vld [vmem:[%s3 + $0x50] sm:$0xff]
        %v510 = vld [vmem:[%s3 + $0x58] sm:$0xff]
        %v511 = vld [vmem:[%s3 + $0x60] sm:$0xff]
        %v512 = vld [vmem:[%s3 + $0x68] sm:$0xff]
        %v513 = vld [vmem:[%s3 + $0x70] sm:$0xff]
        %v514 = vld [vmem:[%s3 + $0x78] sm:$0xff]
        %516 = vset.pattern.permute.xlu0 0
        %517 = vperm.xlu0 %516, %v499
        %v518 = vpop.permute.xlu0 %517
        %521 = vset.pattern.permute.xlu0 0
        %522 = vperm.xlu0 %521, %v500
        %v523 = vpop.permute.xlu0 %522
        %526 = vset.pattern.permute.xlu0 0
        %527 = vperm.xlu0 %526, %v501
        %v528 = vpop.permute.xlu0 %527
        %531 = vset.pattern.permute.xlu0 0
        %532 = vperm.xlu0 %531, %v502
        %v533 = vpop.permute.xlu0 %532
        %536 = vset.pattern.permute.xlu0 0
        %537 = vperm.xlu0 %536, %v503
        %v538 = vpop.permute.xlu0 %537
        %541 = vset.pattern.permute.xlu0 0
        %542 = vperm.xlu0 %541, %v504
        %v543 = vpop.permute.xlu0 %542
        %546 = vset.pattern.permute.xlu0 0
        %547 = vperm.xlu0 %546, %v505
        %v548 = vpop.permute.xlu0 %547
        %551 = vset.pattern.permute.xlu0 0
        %552 = vperm.xlu0 %551, %v506
        %v553 = vpop.permute.xlu0 %552
        %556 = vset.pattern.permute.xlu0 0
        %557 = vperm.xlu0 %556, %v507
        %v558 = vpop.permute.xlu0 %557
        %561 = vset.pattern.permute.xlu0 0
        %562 = vperm.xlu0 %561, %v508
        %v563 = vpop.permute.xlu0 %562
        %566 = vset.pattern.permute.xlu0 0
        %567 = vperm.xlu0 %566, %v509
        %v568 = vpop.permute.xlu0 %567
        %571 = vset.pattern.permute.xlu0 0
        %572 = vperm.xlu0 %571, %v510
        %v573 = vpop.permute.xlu0 %572
        %576 = vset.pattern.permute.xlu0 0
        %577 = vperm.xlu0 %576, %v511
        %v578 = vpop.permute.xlu0 %577
        %581 = vset.pattern.permute.xlu0 0
        %582 = vperm.xlu0 %581, %v512
        %v583 = vpop.permute.xlu0 %582
        %586 = vset.pattern.permute.xlu0 0
        %587 = vperm.xlu0 %586, %v513
        %v588 = vpop.permute.xlu0 %587
        %591 = vset.pattern.permute.xlu0 0
        %592 = vperm.xlu0 %591, %v514
        %v593 = vpop.permute.xlu0 %592
        %v611 = vunpack.c.l.b16 %v475
        %v612 = vunpack.c.l.b16 %v476
        %v613 = vunpack.c.l.b16 %v477
        %v614 = vunpack.c.l.b16 %v478
        %v615 = vunpack.c.l.b16 %v479
        %v616 = vunpack.c.l.b16 %v480
        %v617 = vunpack.c.l.b16 %v481
        %v618 = vunpack.c.l.b16 %v482
        %v619 = vunpack.c.l.b16 %v483
        %v620 = vunpack.c.l.b16 %v484
        %v621 = vunpack.c.l.b16 %v485
        %v622 = vunpack.c.l.b16 %v486
        %v623 = vunpack.c.l.b16 %v487
        %v624 = vunpack.c.l.b16 %v488
        %v625 = vunpack.c.l.b16 %v489
        %v626 = vunpack.c.l.b16 %v490
        %v627 = vpack.c.b16 %v612, %v611
        %v628 = vpack.c.b16 %v614, %v613
        %v629 = vpack.c.b16 %v616, %v615
        %v630 = vpack.c.b16 %v618, %v617
        %v631 = vpack.c.b16 %v620, %v619
        %v632 = vpack.c.b16 %v622, %v621
        %v633 = vpack.c.b16 %v624, %v623
        %v634 = vpack.c.b16 %v626, %v625
        %643 = vmatprep.subr.bf16.mxu0 0
        %644 = vmatpush1.bf16.msra.mxu0 %v491
        %645 = vmatprep.subr.bf16.mxu0 0
        %646 = vmatpush1.bf16.msra.mxu0 %v492
        %647 = vmatprep.subr.bf16.mxu0 0
        %648 = vmatpush1.bf16.msra.mxu0 %v493
        %649 = vmatprep.subr.bf16.mxu0 0
        %650 = vmatpush1.bf16.msra.mxu0 %v494
        %651 = vmatprep.subr.bf16.mxu0 0
        %652 = vmatpush1.bf16.msra.mxu0 %v495
        %653 = vmatprep.subr.bf16.mxu0 0
        %654 = vmatpush1.bf16.msra.mxu0 %v496
        %655 = vmatprep.subr.bf16.mxu0 0
        %656 = vmatpush1.bf16.msra.mxu0 %v497
        %657 = vmatprep.subr.bf16.mxu0 0
        %658 = vmatpush1.bf16.msra.mxu0 %v498
        %659 = vmatprep.subr.bf16.mxu0 0
        %660 = vmatpush1.bf16.msra.mxu0 0
        %661 = vmatprep.subr.bf16.mxu0 0
        %662 = vmatpush1.bf16.msra.mxu0 0
        %663 = vmatprep.subr.bf16.mxu0 0
        %664 = vmatpush1.bf16.msra.mxu0 0
        %665 = vmatprep.subr.bf16.mxu0 0
        %666 = vmatpush1.bf16.msra.mxu0 0
        %667 = vmatprep.subr.bf16.mxu0 0
        %668 = vmatpush1.bf16.msra.mxu0 0
        %669 = vmatprep.subr.bf16.mxu0 0
        %670 = vmatpush1.bf16.msra.mxu0 0
        %671 = vmatprep.subr.bf16.mxu0 0
        %672 = vmatpush1.bf16.msra.mxu0 0
        %673 = vmatprep.subr.bf16.mxu0 0
        %674 = vmatpush1.bf16.msra.mxu0 0
        %675 = vmatprep.mubr.bf16.mxu0 0
        %676 = vmatmul.mubr.bf16.gmra.mrb[0].mxu0 %v627
        %v677 = vpop.f32.mrb[0].mxu0
        %v678 = vadd.f32 %v518, %v677
        %v679 = vpop.f32.mrb[0].mxu0
        %v680 = vpop.f32.mrb[0].mxu0
        %v681 = vadd.f32 %v523, %v680
        %v682 = vpop.f32.mrb[0].mxu0
        %683 = vmatprep.mubr.bf16.mxu0 0
        %684 = vmatmul.mubr.bf16.gmra.mrb[0].mxu0 %v628
        %v685 = vpop.f32.mrb[0].mxu0
        %v686 = vadd.f32 %v528, %v685
        %v687 = vpop.f32.mrb[0].mxu0
        %v688 = vpop.f32.mrb[0].mxu0
        %v689 = vadd.f32 %v533, %v688
        %v690 = vpop.f32.mrb[0].mxu0
        %691 = vmatprep.mubr.bf16.mxu0 0
        %692 = vmatmul.mubr.bf16.gmra.mrb[0].mxu0 %v629
        %v693 = vpop.f32.mrb[0].mxu0
        %v694 = vadd.f32 %v538, %v693
        %v695 = vpop.f32.mrb[0].mxu0
        %v696 = vpop.f32.mrb[0].mxu0
        %v697 = vadd.f32 %v543, %v696
        %v698 = vpop.f32.mrb[0].mxu0
        %699 = vmatprep.mubr.bf16.mxu0 0
        %700 = vmatmul.mubr.bf16.gmra.mrb[0].mxu0 %v630
        %v701 = vpop.f32.mrb[0].mxu0
        %v702 = vadd.f32 %v548, %v701
        %v703 = vpop.f32.mrb[0].mxu0
        %v704 = vpop.f32.mrb[0].mxu0
        %v705 = vadd.f32 %v553, %v704
        %v706 = vpop.f32.mrb[0].mxu0
        %707 = vmatprep.mubr.bf16.mxu0 0
        %708 = vmatmul.mubr.bf16.gmra.mrb[0].mxu0 %v631
        %v709 = vpop.f32.mrb[0].mxu0
        %v710 = vadd.f32 %v558, %v709
        %v711 = vpop.f32.mrb[0].mxu0
        %v712 = vpop.f32.mrb[0].mxu0
        %v713 = vadd.f32 %v563, %v712
        %v714 = vpop.f32.mrb[0].mxu0
        %715 = vmatprep.mubr.bf16.mxu0 0
        %716 = vmatmul.mubr.bf16.gmra.mrb[0].mxu0 %v632
        %v717 = vpop.f32.mrb[0].mxu0
        %v718 = vadd.f32 %v568, %v717
        %v719 = vpop.f32.mrb[0].mxu0
        %v720 = vpop.f32.mrb[0].mxu0
        %v721 = vadd.f32 %v573, %v720
        %v722 = vpop.f32.mrb[0].mxu0
        %723 = vmatprep.mubr.bf16.mxu0 0
        %724 = vmatmul.mubr.bf16.gmra.mrb[0].mxu0 %v633
        %v725 = vpop.f32.mrb[0].mxu0
        %v726 = vadd.f32 %v578, %v725
        %v727 = vpop.f32.mrb[0].mxu0
        %v728 = vpop.f32.mrb[0].mxu0
        %v729 = vadd.f32 %v583, %v728
        %v730 = vpop.f32.mrb[0].mxu0
        %731 = vmatprep.mubr.bf16.mxu0 0
        %732 = vmatmul.mubr.bf16.gmra.mrb[0].mxu0 %v634
        %v733 = vpop.f32.mrb[0].mxu0
        %v734 = vadd.f32 %v588, %v733
        %v735 = vpop.f32.mrb[0].mxu0
        %v736 = vpop.f32.mrb[0].mxu0
        %v737 = vadd.f32 %v593, %v736
        %v738 = vpop.f32.mrb[0].mxu0
        %739 = vdwg.mxu0
        %v740 = vmax.f32 %v678, 0.0
        %v741 = vmax.f32 %v681, 0.0
        %v742 = vmax.f32 %v686, 0.0
        %v743 = vmax.f32 %v689, 0.0
        %v744 = vmax.f32 %v694, 0.0
        %v745 = vmax.f32 %v697, 0.0
        %v746 = vmax.f32 %v702, 0.0
        %v747 = vmax.f32 %v705, 0.0
        %v748 = vmax.f32 %v710, 0.0
        %v749 = vmax.f32 %v713, 0.0
        %v750 = vmax.f32 %v718, 0.0
        %v751 = vmax.f32 %v721, 0.0
        %v752 = vmax.f32 %v726, 0.0
        %v753 = vmax.f32 %v729, 0.0
        %v754 = vmax.f32 %v734, 0.0
        %v755 = vmax.f32 %v737, 0.0
        %v756 = vld [vmem:[%s4] sm:$0xf]
        %v757 = vpack.c.bf16 %v741, %v740
        %v758 = vpack.c.bf16 %v743, %v742
        %v759 = vpack.c.bf16 %v745, %v744
        %v760 = vpack.c.bf16 %v747, %v746
        %v761 = vpack.c.bf16 %v749, %v748
        %v762 = vpack.c.bf16 %v751, %v750
        %v763 = vpack.c.bf16 %v753, %v752
        %v764 = vpack.c.bf16 %v755, %v754
        %v765 = vld [vmem:[%s5] sm:$0xff]
        %767 = vset.pattern.permute.xlu0 0
        %768 = vperm.xlu0 %767, %v765
        %v769 = vpop.permute.xlu0 %768
        %771 = vmatprep.subr.bf16.mxu0 0
        %772 = vmatpush1.bf16.msra.mxu0 %v757
        %773 = vmatprep.subr.bf16.mxu0 0
        %774 = vmatpush1.bf16.msra.mxu0 %v758
        %775 = vmatprep.subr.bf16.mxu0 0
        %776 = vmatpush1.bf16.msra.mxu0 %v759
        %777 = vmatprep.subr.bf16.mxu0 0
        %778 = vmatpush1.bf16.msra.mxu0 %v760
        %779 = vmatprep.subr.bf16.mxu0 0
        %780 = vmatpush1.bf16.msra.mxu0 %v761
        %781 = vmatprep.subr.bf16.mxu0 0
        %782 = vmatpush1.bf16.msra.mxu0 %v762
        %783 = vmatprep.subr.bf16.mxu0 0
        %784 = vmatpush1.bf16.msra.mxu0 %v763
        %785 = vmatprep.subr.bf16.mxu0 0
        %786 = vmatpush1.bf16.msra.mxu0 %v764
        %787 = vmatprep.subr.bf16.mxu0 0
        %788 = vmatpush1.bf16.msra.mxu0 0
        %789 = vmatprep.subr.bf16.mxu0 0
        %790 = vmatpush1.bf16.msra.mxu0 0
        %791 = vmatprep.subr.bf16.mxu0 0
        %792 = vmatpush1.bf16.msra.mxu0 0
        %793 = vmatprep.subr.bf16.mxu0 0
        %794 = vmatpush1.bf16.msra.mxu0 0
        %795 = vmatprep.subr.bf16.mxu0 0
        %796 = vmatpush1.bf16.msra.mxu0 0
        %797 = vmatprep.subr.bf16.mxu0 0
        %798 = vmatpush1.bf16.msra.mxu0 0
        %799 = vmatprep.subr.bf16.mxu0 0
        %800 = vmatpush1.bf16.msra.mxu0 0
        %801 = vmatprep.subr.bf16.mxu0 0
        %802 = vmatpush1.bf16.msra.mxu0 0
        %803 = vmatprep.mubr.bf16.mxu0 0
        %804 = vmatmul.mubr.bf16.gmra.mrb[0].mxu0 %v756
        %v805 = vpop.f32.mrb[0].mxu0
        %v806 = vadd.f32 %v769, %v805
        %v807 = vpop.f32.mrb[0].mxu0
        %v808 = vpop.f32.mrb[0].mxu0
        %v809 = vpop.f32.mrb[0].mxu0
        %810 = vdwg.mxu0
        %v811 = vlaneseq
        %v812 = vshrl.u32 %v811, 7
        %vm813 = vcmp.lt.s32.totalorder %v812, 3
        %v814 = vxor.u32 %v806, 2147483648
        %v815 = vmul.f32 %v814, 1.442695
        %v816 = vpow.pop %v815
        %v817 = vadd.f32 %v816, 1.0
        %v818 = vrcp.pop %v817
        %v819 = vmul.f32 1.0, %v818
        %v820 = vmax.f32 %v806, 0.0
        %v821 = vsel %vm813, %v819, %v820
        %822 = vst [vmem:[%s242] sm:$0xff] %v821
        %s823 = sand.u32 %s159, 1
        %s824 = scalar_lea.sflag [#allocation3], %s823
        %s825 = sand.u32 %s159, 1
        %s826 = smul.addr %s825, 8
        %s827 = scalar_lea.vmem [#allocation2], %s826
        // Predicated region
        $region45: #{tpu_custom_call.1} parent=43 // pred_check
          %p828 = pneg %p169
        $region46: #{tpu_custom_call.1} parent=43 // pred_check_branch
          %830 = sbr.rel (%p828) target = $region48
        $region47: #{tpu_custom_call.1} parent=43 // pred_region
          %s832 = ssub.s32 128, 128
          %833 = vsyncadd %s824, %s832
          %s834 = smul.addr %s20, 128
          %s835 = scalar_lea.hbm %s6, %s834
          %s837 = sshll.u32 %s827, 4
          %s838 = int_to_ptr.vmem [resolvable:$true] %s837
          %840 = dma.vmem_to_hbm [thread:$0]  %s838, 128, %s835, %s824
        $region48: #{tpu_custom_call.1} parent=43 // pred_fallthru
          _
      $region44: #{tpu_custom_call.1} parent=5 // pred_fallthru
        _
      %p841 = scmp.le.s32.totalorder 2, %s15
      // Predicated region
      $region49: #{tpu_custom_call.1} parent=5 // pred_check
        %p842 = pneg %p841
      $region50: #{tpu_custom_call.1} parent=5 // pred_check_branch
        %844 = sbr.rel (%p842) target = $region52
      $region51: #{tpu_custom_call.1} parent=5 // pred_region
        %s845 = ssub.s32 %s15, 2
        // Predicated region
        $region53: #{tpu_custom_call.1} parent=51 // pred_check
          %p846 = pneg %p175
        $region54: #{tpu_custom_call.1} parent=51 // pred_check_branch
          %848 = sbr.rel (%p846) target = $region56
        $region55: #{tpu_custom_call.1} parent=51 // pred_region
          %s849 = sand.u32 %s160, 1
          %s850 = scalar_lea.sflag [#allocation3], %s849
          %s851 = sand.u32 %s160, 1
          %s852 = smul.addr %s851, 8
          %s853 = scalar_lea.vmem [#allocation2], %s852
          %854 = dma.done %s850, 128
        $region56: #{tpu_custom_call.1} parent=51 // pred_fallthru
          _
      $region52: #{tpu_custom_call.1} parent=5 // pred_fallthru
        _
    $region6: #{tpu_custom_call.1} parent=1 // loop_footer
      %s19 = sadd.s32 1, %s15
    $region7: #{tpu_custom_call.1} parent=1 // loop_footer_branch
      %14 = sbr.rel target = $region3
    $region8: #{tpu_custom_call.1} parent=1 // loop_exit
      _
    %855 = vsyncpa [#allocation3], 1
    %s856 = scalar_lea.sflag [#allocation3], 1
    %857 = vsyncpa %s856, 1

</llo_original>
